<compile_context>
chip_gen: v7x
topology: tpu7x:2x2x1
jax: 0.10.0
libtpu: 0.0.40
codegen_flags: <defaults>
</compile_context>

<pallas_src>
import jax
import jax.numpy as jnp
from jax.experimental import pallas as pl
from jax.experimental.pallas import tpu as pltpu


def _round_up(n, m):
    return (n + m - 1) // m * m


def _pick_tile(dim, target, base):
    """Largest multiple-of-`base` divisor of `dim` that is <= target, else dim."""
    if dim <= target:
        return dim
    t = (target // base) * base
    while t >= base:
        if dim % t == 0:
            return t
        t -= base
    return dim


# ----------------------------------------------------------------------------
# Kernel 1: fused GIN MLP (Linear -> relu -> Linear) + residual.
# One big (M, F) problem, M = nvars_p * bs * n_heads rows, tiled over M.
# ----------------------------------------------------------------------------
def _gin_mlp_kernel(x_ref, w1_ref, b1_ref, w2_ref, b2_ref, o_ref):
    x = x_ref[...]                                                   # (tm, F)
    h = jnp.dot(x, w1_ref[...], preferred_element_type=jnp.float32) + b1_ref[...]
    h = jnp.maximum(h, 0.0)                                          # relu
    # nn.Dropout in eval mode == identity
    o_ref[...] = (jnp.dot(h, w2_ref[...], preferred_element_type=jnp.float32)
                  + b2_ref[...] + x).astype(o_ref.dtype)


def gin_mlp(x, w1, b1, w2, b2, *, tm_target=512):
    M, F = x.shape
    dm = w1.shape[1]
    tm = _pick_tile(M, tm_target, 8)
    return pl.pallas_call(
        _gin_mlp_kernel,
        out_shape=jax.ShapeDtypeStruct((M, F), x.dtype),
        grid=(M // tm,),
        in_specs=[
            pl.BlockSpec((tm, F), lambda i: (i, 0)),
            pl.BlockSpec((F, dm), lambda i: (0, 0)),
            pl.BlockSpec((1, dm), lambda i: (0, 0)),
            pl.BlockSpec((dm, F), lambda i: (0, 0)),
            pl.BlockSpec((1, F), lambda i: (0, 0)),
        ],
        out_specs=pl.BlockSpec((tm, F), lambda i: (i, 0)),
        compiler_params=pltpu.CompilerParams(dimension_semantics=("parallel",)),
    )(x, w1, b1, w2, b2)


# ----------------------------------------------------------------------------
# Kernel 2: adjacency matmul  adj (V, V) @ Y (V, N)  with N = BH*F (lane-dense).
# Tiled over N; V is already padded to a sublane multiple in the wrapper.
# ----------------------------------------------------------------------------
def _adj_kernel(adj_ref, y_ref, o_ref):
    o_ref[...] = jnp.dot(adj_ref[...], y_ref[...],
                         preferred_element_type=jnp.float32).astype(o_ref.dtype)


def adj_matmul(adj, y, *, tn_target=4096):
    V = adj.shape[0]
    N = y.shape[1]
    tn = _pick_tile(N, tn_target, 128)
    return pl.pallas_call(
        _adj_kernel,
        out_shape=jax.ShapeDtypeStruct((V, N), y.dtype),
        grid=(N // tn,),
        in_specs=[
            pl.BlockSpec((V, V), lambda j: (0, 0)),
            pl.BlockSpec((V, tn), lambda j: (0, j)),
        ],
        out_specs=pl.BlockSpec((V, tn), lambda j: (0, j)),
        compiler_params=pltpu.CompilerParams(dimension_semantics=("parallel",)),
    )(adj, y)


# ----------------------------------------------------------------------------
# Kernel 3: output Linear  (bs*nvars, PD) @ (PD, PD) + bias.
# Standard M/N-parallel, K-reduction ("arbitrary") tiled matmul with a VMEM
# f32 accumulator; bias added once at finalize.  Tile sizes are small enough
# to stay well inside scoped VMEM on v5e/v6e/v7x.
# ----------------------------------------------------------------------------
def _linear_kernel(x_ref, w_ref, b_ref, o_ref, acc_ref):
    @pl.when(pl.program_id(2) == 0)
    def _():
        acc_ref[...] = jnp.zeros_like(acc_ref)

    acc_ref[...] += jnp.dot(x_ref[...], w_ref[...],
                            preferred_element_type=jnp.float32)

    @pl.when(pl.program_id(2) == pl.num_programs(2) - 1)
    def _():
        o_ref[...] = (acc_ref[...] + b_ref[...]).astype(o_ref.dtype)


def linear(x, w, b, *, tm_target=256, tn_target=256, tk_target=512):
    M, K = x.shape
    N = w.shape[1]
    tm = _pick_tile(M, tm_target, 8)
    tn = _pick_tile(N, tn_target, 128)
    tk = _pick_tile(K, tk_target, 128)
    return pl.pallas_call(
        _linear_kernel,
        out_shape=jax.ShapeDtypeStruct((M, N), x.dtype),
        grid=(M // tm, N // tn, K // tk),
        in_specs=[
            pl.BlockSpec((tm, tk), lambda i, j, k: (i, k)),
            pl.BlockSpec((tk, tn), lambda i, j, k: (k, j)),
            pl.BlockSpec((1, tn), lambda i, j, k: (0, j)),
        ],
        out_specs=pl.BlockSpec((tm, tn), lambda i, j, k: (i, j)),
        scratch_shapes=[pltpu.VMEM((tm, tn), jnp.float32)],
        compiler_params=pltpu.CompilerParams(
            dimension_semantics=("parallel", "parallel", "arbitrary")),
    )(x, w, b)


# ----------------------------------------------------------------------------
# Forward pass (glue reshapes/permutes in plain JAX, matmuls in Pallas)
# ----------------------------------------------------------------------------
def gin_forward(z, adj, params, n_heads):
    bs, nvars, patch_num, d_forward = z.shape
    d_head = d_forward // n_heads
    F = d_head * patch_num
    BH = bs * n_heads
    PD = patch_num * d_forward

    # z.view(bs, nvars, P, H, dh).permute(0, 3, 1, 4, 2).flatten(-2), but with
    # nvars moved to the front so the adjacency sees a (nvars, BH*F) matrix and
    # the MLP a (nvars*BH, F) matrix via trivial row-major collapses only.
    x = jnp.transpose(z.reshape(bs, nvars, patch_num, n_heads, d_head),
                      (1, 0, 3, 4, 2))                 # (nvars, bs, H, dh, P)
    x = x.reshape(nvars, BH, F)

    # Pad nvars to the f32 sublane multiple; zero-pad adj so padded rows/cols
    # never contribute to real outputs.
    nvars_p = _round_up(nvars, 8)
    if nvars_p != nvars:
        x = jnp.pad(x, ((0, nvars_p - nvars), (0, 0), (0, 0)))
        adj_p = jnp.pad(adj, ((0, nvars_p - nvars), (0, nvars_p - nvars)))
    else:
        adj_p = adj

    # Kernel 1: fused gnn MLP + residual over all rows at once.
    y = gin_mlp(x.reshape(nvars_p * BH, F),
                params["w1"], params["b1"], params["w2"], params["b2"])

    # Kernel 2: adjacency matmul with lane-dense N = BH*F.
    o = adj_matmul(adj_p, y.reshape(nvars_p, BH * F))   # (nvars_p, BH*F)
    o = o[:nvars]

    # out.view(bs, H, nvars, P, dh): deliberate reinterpretation of the (dh, P)
    # flatten as (P, dh), exactly as the PyTorch .view does.
    o = o.reshape(nvars, bs, n_heads, patch_num, d_head)
    o = jnp.transpose(o, (1, 0, 3, 2, 4))               # (bs, nvars, P, H, dh)
    o = o.reshape(bs * nvars, PD)

    out = linear(o, params["wo"], params["bo"])
    return out.reshape(bs, nvars, patch_num, d_forward)


# ----------------------------------------------------------------------------
# Pure-JAX reference for validation
# ----------------------------------------------------------------------------
def gin_reference(z, adj, p, n_heads):
    bs, nvars, P, D = z.shape
    dh = D // n_heads
    F = dh * P
    x = jnp.transpose(z.reshape(bs, nvars, P, n_heads, dh),
                      (0, 3, 1, 4, 2)).reshape(bs, n_heads, nvars, F)
    h = jax.nn.relu(x @ p["w1"] + p["b1"][0])
    y = h @ p["w2"] + p["b2"][0] + x
    out = jnp.einsum("uv,bhvf->bhuf", adj, y)
    out = out.reshape(bs, n_heads, nvars, P, dh)
    out = jnp.transpose(out, (0, 2, 3, 1, 4)).reshape(bs, nvars, P * D)
    out = out @ p["wo"] + p["bo"][0]
    return out.reshape(bs, nvars, P, D)


if __name__ == "__main__":
    # small, module-consistent shapes
    bs, nvars, patch_num, d_forward = 2, 4, 8, 32
    n_heads, d_mutual = 4, 32
    d_head = d_forward // n_heads
    F = d_head * patch_num                 # gnn linear in/out features
    PD = patch_num * d_forward             # output_linear features

    key = jax.random.PRNGKey(0)
    k = jax.random.split(key, 8)

    # deterministic synthetic parameters (stored as (in, out), i.e. W.T of torch)
    params = {
        "w1": jax.random.normal(k[0], (F, d_mutual), jnp.float32) * 0.05,
        "b1": jax.random.normal(k[1], (1, d_mutual), jnp.float32) * 0.05,
        "w2": jax.random.normal(k[2], (d_mutual, F), jnp.float32) * 0.05,
        "b2": jax.random.normal(k[3], (1, F), jnp.float32) * 0.05,
        "wo": jax.random.normal(k[4], (PD, PD), jnp.float32) * 0.02,
        "bo": jax.random.normal(k[5], (1, PD), jnp.float32) * 0.02,
    }

    z = jax.random.normal(k[6], (bs, nvars, patch_num, d_forward), jnp.float32)
    adj = jax.random.normal(k[7], (nvars, nvars), jnp.float32) * 0.5

    out = gin_forward(z, adj, params, n_heads)
    out = jax.block_until_ready(out)

    ref = gin_reference(z, adj, params, n_heads)
    assert out.shape == (bs, nvars, patch_num, d_forward)
    assert jnp.allclose(out, ref, atol=1e-4, rtol=1e-4), \
        f"max abs err {jnp.max(jnp.abs(out - ref))}"

    print("KERNEL_OK")
</pallas_src>

<mosaic_0001>
module attributes {stable_mosaic.version = 11 : i64} {
  func.func @_gin_mlp_kernel(%arg0: i32, %arg1: memref<64x64xf32, #tpu.memory_space<vmem>>, %arg2: memref<64x32xf32, #tpu.memory_space<vmem>>, %arg3: memref<1x32xf32, #tpu.memory_space<vmem>>, %arg4: memref<32x64xf32, #tpu.memory_space<vmem>>, %arg5: memref<1x64xf32, #tpu.memory_space<vmem>>, %arg6: memref<64x64xf32, #tpu.memory_space<vmem>>) attributes {dimension_semantics = [#tpu.dimension_semantics<parallel>], iteration_bounds = array<i64: 1>, scalar_prefetch = 0 : i64, scratch_operands = 0 : i64, tpu.core_type = #tpu.core_type<tc>, window_params = [{transform_indices = @transform_0, window_bounds = array<i64: 64, 64>}, {pipeline_mode = #tpu.pipeline_mode<synchronous>, transform_indices = @transform_1, window_bounds = array<i64: 64, 32>}, {pipeline_mode = #tpu.pipeline_mode<synchronous>, transform_indices = @transform_2, window_bounds = array<i64: 1, 32>}, {pipeline_mode = #tpu.pipeline_mode<synchronous>, transform_indices = @transform_3, window_bounds = array<i64: 32, 64>}, {pipeline_mode = #tpu.pipeline_mode<synchronous>, transform_indices = @transform_4, window_bounds = array<i64: 1, 64>}, {transform_indices = @transform_5, window_bounds = array<i64: 64, 64>}]} {
    %c0 = arith.constant 0 : index
    %c0_0 = arith.constant 0 : index
    %0 = vector.load %arg1[%c0, %c0_0] : memref<64x64xf32, #tpu.memory_space<vmem>>, vector<64x64xf32>
    %c0_1 = arith.constant 0 : index
    %c0_2 = arith.constant 0 : index
    %1 = vector.load %arg2[%c0_1, %c0_2] : memref<64x32xf32, #tpu.memory_space<vmem>>, vector<64x32xf32>
    %cst = arith.constant dense<0.000000e+00> : vector<64x32xf32>
    %2 = tpu.matmul %0, %1, %cst {dimension_numbers = #tpu.dot_dimension_numbers<[1], [0], [0], [1], [0, 0, 1, 1], [], []>} : vector<64x64xf32>, vector<64x32xf32>, vector<64x32xf32> -> vector<64x32xf32>
    %c0_3 = arith.constant 0 : index
    %c0_4 = arith.constant 0 : index
    %3 = vector.load %arg3[%c0_3, %c0_4] : memref<1x32xf32, #tpu.memory_space<vmem>>, vector<1x32xf32>
    %4 = vector.broadcast %3 : vector<1x32xf32> to vector<64x32xf32>
    %5 = arith.addf %2, %4 : vector<64x32xf32>
    %cst_5 = arith.constant 0.000000e+00 : f32
    %6 = vector.broadcast %cst_5 : f32 to vector<64x32xf32>
    %7 = arith.maximumf %5, %6 : vector<64x32xf32>
    %c0_6 = arith.constant 0 : index
    %c0_7 = arith.constant 0 : index
    %8 = vector.load %arg4[%c0_6, %c0_7] : memref<32x64xf32, #tpu.memory_space<vmem>>, vector<32x64xf32>
    %cst_8 = arith.constant dense<0.000000e+00> : vector<64x64xf32>
    %9 = tpu.matmul %7, %8, %cst_8 {dimension_numbers = #tpu.dot_dimension_numbers<[1], [0], [0], [1], [0, 0, 1, 1], [], []>} : vector<64x32xf32>, vector<32x64xf32>, vector<64x64xf32> -> vector<64x64xf32>
    %c0_9 = arith.constant 0 : index
    %c0_10 = arith.constant 0 : index
    %10 = vector.load %arg5[%c0_9, %c0_10] : memref<1x64xf32, #tpu.memory_space<vmem>>, vector<1x64xf32>
    %11 = vector.broadcast %10 : vector<1x64xf32> to vector<64x64xf32>
    %12 = arith.addf %9, %11 : vector<64x64xf32>
    %13 = arith.addf %12, %0 : vector<64x64xf32>
    %c0_11 = arith.constant 0 : index
    %c0_12 = arith.constant 0 : index
    %14 = vector.load %arg6[%c0_11, %c0_12] : memref<64x64xf32, #tpu.memory_space<vmem>>, vector<64x64xf32>
    tpu.vector_store %arg6[%c0_11, %c0_12], %13 {strides = array<i32>} : memref<64x64xf32, #tpu.memory_space<vmem>>, vector<64x64xf32>,
    return
  }
  func.func @transform_0(%arg0: i32) -> (i32, i32) {
    %c0_i32 = arith.constant 0 : i32
    %c0_i32_0 = arith.constant 0 : i32
    return %arg0, %c0_i32 : i32, i32
  }
  func.func @transform_1(%arg0: i32) -> (i32, i32) {
    %c0_i32 = arith.constant 0 : i32
    %c0_i32_0 = arith.constant 0 : i32
    %c0_i32_1 = arith.constant 0 : i32
    return %c0_i32, %c0_i32_0 : i32, i32
  }
  func.func @transform_2(%arg0: i32) -> (i32, i32) {
    %c0_i32 = arith.constant 0 : i32
    %c0_i32_0 = arith.constant 0 : i32
    %c0_i32_1 = arith.constant 0 : i32
    return %c0_i32, %c0_i32_0 : i32, i32
  }
  func.func @transform_3(%arg0: i32) -> (i32, i32) {
    %c0_i32 = arith.constant 0 : i32
    %c0_i32_0 = arith.constant 0 : i32
    %c0_i32_1 = arith.constant 0 : i32
    return %c0_i32, %c0_i32_0 : i32, i32
  }
  func.func @transform_4(%arg0: i32) -> (i32, i32) {
    %c0_i32 = arith.constant 0 : i32
    %c0_i32_0 = arith.constant 0 : i32
    %c0_i32_1 = arith.constant 0 : i32
    return %c0_i32, %c0_i32_0 : i32, i32
  }
  func.func @transform_5(%arg0: i32) -> (i32, i32) {
    %c0_i32 = arith.constant 0 : i32
    %c0_i32_0 = arith.constant 0 : i32
    return %arg0, %c0_i32 : i32, i32
  }
}

</mosaic_0001>

<llo_original>
// kernel: tpu_custom_call.1
$region0: #{tpu_custom_call.1}
  #allocation0 [shape = 'u32[]', space=smem, size = 0x4, offset = 0x4, fixed_abs, tag = 'smem constant byte address 0x4 - core index']
  #allocation1 [shape = 'u32[144,128]{1,0:T(1,128)}', space=vmem, size = 0x12000, scoped, tag = 'internal scratch']
  %s0 = inlined_call_operand.vmem [shape: f32[64,64], index: 0, kind: input, shape index: {}]
  %s1 = inlined_call_operand.vmem [shape: f32[64,32], index: 1, kind: input, shape index: {}]
  %s2 = inlined_call_operand.vmem [shape: f32[1,32], index: 2, kind: input, shape index: {}]
  %s3 = inlined_call_operand.vmem [shape: f32[32,64], index: 3, kind: input, shape index: {}]
  %s4 = inlined_call_operand.vmem [shape: f32[1,64], index: 4, kind: input, shape index: {}]
  %s5 = inlined_call_operand.hbm [shape: f32[64,64], index: 5, kind: output, shape index: {}]
  %s6 = sld [smem:[#allocation0]]
  $region30: #{tpu_custom_call.1} parent=0
    _
  %s8 = ssub.s32 1, %s6
  %s9 = scalar_select 0, %s8, %s6
  $region1: #{tpu_custom_call.1} parent=0
    #allocation2 [shape = 'u8[32768]{0}', space=vmem, size = 0x8000, scoped, tag = 'output window, operand 0, single buffered']
    #allocation3 [shape = 's32[1]{0}', space=sflag, size = 0x4, scoped, tag = 'scoped memory for tpu_custom_call.1']
    %10 = vsyncpa [#allocation3], 0
    // Predicated region
    $region2: #{tpu_custom_call.1} parent=1 // pred_check
      _
    $region3: #{tpu_custom_call.1} parent=1 // pred_check_branch
      %12 = sbr.rel (0) target = $region5
    $region4: #{tpu_custom_call.1} parent=1 // pred_region
      _
    $region5: #{tpu_custom_call.1} parent=1 // pred_fallthru
      _
    // Predicated region
    $region6: #{tpu_custom_call.1} parent=1 // pred_check
      _
    $region7: #{tpu_custom_call.1} parent=1 // pred_check_branch
      %14 = sbr.rel (0) target = $region9
    $region8: #{tpu_custom_call.1} parent=1 // pred_region
      _
    $region9: #{tpu_custom_call.1} parent=1 // pred_fallthru
      _
    // Predicated region
    $region10: #{tpu_custom_call.1} parent=1 // pred_check
      _
    $region11: #{tpu_custom_call.1} parent=1 // pred_check_branch
      %16 = sbr.rel (0) target = $region13
    $region12: #{tpu_custom_call.1} parent=1 // pred_region
      _
    $region13: #{tpu_custom_call.1} parent=1 // pred_fallthru
      _
    // Predicated region
    $region14: #{tpu_custom_call.1} parent=1 // pred_check
      _
    $region15: #{tpu_custom_call.1} parent=1 // pred_check_branch
      %18 = sbr.rel (0) target = $region17
    $region16: #{tpu_custom_call.1} parent=1 // pred_region
      _
    $region17: #{tpu_custom_call.1} parent=1 // pred_fallthru
      _
    // Predicated region
    $region18: #{tpu_custom_call.1} parent=1 // pred_check
      _
    $region19: #{tpu_custom_call.1} parent=1 // pred_check_branch
      %20 = sbr.rel (0) target = $region21
    $region20: #{tpu_custom_call.1} parent=1 // pred_region
      _
    $region21: #{tpu_custom_call.1} parent=1 // pred_fallthru
      _
    %v21 = vld [vmem:[%s0] sm:$0xff]
    %v22 = vld [vmem:[%s0 + $0x8] sm:$0xff]
    %v23 = vld [vmem:[%s0 + $0x10] sm:$0xff]
    %v24 = vld [vmem:[%s0 + $0x18] sm:$0xff]
    %v25 = vld [vmem:[%s0 + $0x20] sm:$0xff]
    %v26 = vld [vmem:[%s0 + $0x28] sm:$0xff]
    %v27 = vld [vmem:[%s0 + $0x30] sm:$0xff]
    %v28 = vld [vmem:[%s0 + $0x38] sm:$0xff]
    %v29 = vld [vmem:[%s1] sm:$0xff]
    %v30 = vld [vmem:[%s1 + $0x8] sm:$0xff]
    %v31 = vld [vmem:[%s1 + $0x10] sm:$0xff]
    %v32 = vld [vmem:[%s1 + $0x18] sm:$0xff]
    %v33 = vld [vmem:[%s1 + $0x20] sm:$0xff]
    %v34 = vld [vmem:[%s1 + $0x28] sm:$0xff]
    %v35 = vld [vmem:[%s1 + $0x30] sm:$0xff]
    %v36 = vld [vmem:[%s1 + $0x38] sm:$0xff]
    %v37 = vld [vmem:[%s2] sm:$0x1]
    %v39 = vlaneseq
    %v40 = vshrl.u32 %v39, 7
    %v41 = vsub.s32 0, %v40
    %v42 = vrot.slane %v37, %v41
    %vm44 = vcmask 523264
    %v46 = vsel %vm44, %v21, 0
    %v49 = vsel %vm44, %v22, 0
    %v52 = vsel %vm44, %v23, 0
    %v55 = vsel %vm44, %v24, 0
    %v58 = vsel %vm44, %v25, 0
    %v61 = vsel %vm44, %v26, 0
    %v64 = vsel %vm44, %v27, 0
    %v67 = vsel %vm44, %v28, 0
    %69 = vmatprep.subr.mxu0 0.0
    %70 = vmatpush1.msra.mxu0 %v29
    %71 = vmatprep.subr.mxu0 0.0
    %72 = vmatpush1.msra.mxu0 %v30
    %73 = vmatprep.subr.mxu0 0.0
    %74 = vmatpush1.msra.mxu0 %v31
    %75 = vmatprep.subr.mxu0 0.0
    %76 = vmatpush1.msra.mxu0 %v32
    %77 = vmatprep.subr.mxu0 0.0
    %78 = vmatpush1.msra.mxu0 %v33
    %79 = vmatprep.subr.mxu0 0.0
    %80 = vmatpush1.msra.mxu0 %v34
    %81 = vmatprep.subr.mxu0 0.0
    %82 = vmatpush1.msra.mxu0 %v35
    %83 = vmatprep.subr.mxu0 0.0
    %84 = vmatpush1.msra.mxu0 %v36
    %85 = vmatprep.subr.mxu0 0.0
    %86 = vmatpush1.msra.mxu0 0.0
    %87 = vmatprep.subr.mxu0 0.0
    %88 = vmatpush1.msra.mxu0 0.0
    %89 = vmatprep.subr.mxu0 0.0
    %90 = vmatpush1.msra.mxu0 0.0
    %91 = vmatprep.subr.mxu0 0.0
    %92 = vmatpush1.msra.mxu0 0.0
    %93 = vmatprep.subr.mxu0 0.0
    %94 = vmatpush1.msra.mxu0 0.0
    %95 = vmatprep.subr.mxu0 0.0
    %96 = vmatpush1.msra.mxu0 0.0
    %97 = vmatprep.subr.mxu0 0.0
    %98 = vmatpush1.msra.mxu0 0.0
    %99 = vmatprep.subr.mxu0 0.0
    %100 = vmatpush1.msra.mxu0 0.0
    %101 = vmatprep.subr.mxu0 0.0
    %102 = vmatpush1.msra.mxu0 0.0
    %103 = vmatprep.subr.mxu0 0.0
    %104 = vmatpush1.msra.mxu0 0.0
    %105 = vmatprep.subr.mxu0 0.0
    %106 = vmatpush1.msra.mxu0 0.0
    %107 = vmatprep.subr.mxu0 0.0
    %108 = vmatpush1.msra.mxu0 0.0
    %109 = vmatprep.subr.mxu0 0.0
    %110 = vmatpush1.msra.mxu0 0.0
    %111 = vmatprep.subr.mxu0 0.0
    %112 = vmatpush1.msra.mxu0 0.0
    %113 = vmatprep.subr.mxu0 0.0
    %114 = vmatpush1.msra.mxu0 0.0
    %115 = vmatprep.subr.mxu0 0.0
    %116 = vmatpush1.msra.mxu0 0.0
    %117 = vmatprep.subr.mxu0 0.0
    %118 = vmatpush1.msra.mxu0 0.0
    %119 = vmatprep.subr.mxu0 0.0
    %120 = vmatpush1.msra.mxu0 0.0
    %121 = vmatprep.subr.mxu0 0.0
    %122 = vmatpush1.msra.mxu0 0.0
    %123 = vmatprep.subr.mxu0 0.0
    %124 = vmatpush1.msra.mxu0 0.0
    %125 = vmatprep.subr.mxu0 0.0
    %126 = vmatpush1.msra.mxu0 0.0
    %127 = vmatprep.subr.mxu0 0.0
    %128 = vmatpush1.msra.mxu0 0.0
    %129 = vmatprep.subr.mxu0 0.0
    %130 = vmatpush1.msra.mxu0 0.0
    %131 = vmatprep.subr.mxu0 0.0
    %132 = vmatpush1.msra.mxu0 0.0
    %133 = vmatprep.mubr.f32.mxu0 0.0
    %134 = vmatmul.mubr.f32.gmra.mrb[0].mxu0 %v46
    %v135 = vpop.f32.mrb[0].mxu0
    %v136 = vadd.f32 %v42, %v135
    %v137 = vpop.f32.mrb[0].mxu0
    %138 = vmatprep.mubr.f32.mxu0 0.0
    %139 = vmatmul.mubr.f32.gmra.mrb[0].mxu0 %v49
    %v140 = vpop.f32.mrb[0].mxu0
    %v141 = vadd.f32 %v42, %v140
    %v142 = vpop.f32.mrb[0].mxu0
    %143 = vmatprep.mubr.f32.mxu0 0.0
    %144 = vmatmul.mubr.f32.gmra.mrb[0].mxu0 %v52
    %v145 = vpop.f32.mrb[0].mxu0
    %v146 = vadd.f32 %v42, %v145
    %v147 = vpop.f32.mrb[0].mxu0
    %148 = vmatprep.mubr.f32.mxu0 0.0
    %149 = vmatmul.mubr.f32.gmra.mrb[0].mxu0 %v55
    %v150 = vpop.f32.mrb[0].mxu0
    %v151 = vadd.f32 %v42, %v150
    %v152 = vpop.f32.mrb[0].mxu0
    %153 = vmatprep.mubr.f32.mxu0 0.0
    %154 = vmatmul.mubr.f32.gmra.mrb[0].mxu0 %v58
    %v155 = vpop.f32.mrb[0].mxu0
    %v156 = vadd.f32 %v42, %v155
    %v157 = vpop.f32.mrb[0].mxu0
    %158 = vmatprep.mubr.f32.mxu0 0.0
    %159 = vmatmul.mubr.f32.gmra.mrb[0].mxu0 %v61
    %v160 = vpop.f32.mrb[0].mxu0
    %v161 = vadd.f32 %v42, %v160
    %v162 = vpop.f32.mrb[0].mxu0
    %163 = vmatprep.mubr.f32.mxu0 0.0
    %164 = vmatmul.mubr.f32.gmra.mrb[0].mxu0 %v64
    %v165 = vpop.f32.mrb[0].mxu0
    %v166 = vadd.f32 %v42, %v165
    %v167 = vpop.f32.mrb[0].mxu0
    %168 = vmatprep.mubr.f32.mxu0 0.0
    %169 = vmatmul.mubr.f32.gmra.mrb[0].mxu0 %v67
    %v170 = vpop.f32.mrb[0].mxu0
    %v171 = vadd.f32 %v42, %v170
    %v172 = vpop.f32.mrb[0].mxu0
    %173 = vdwg.mxu0
    %v174 = vmax.f32 %v136, 0.0
    %v175 = vmax.f32 %v141, 0.0
    %v176 = vmax.f32 %v146, 0.0
    %v177 = vmax.f32 %v151, 0.0
    %v178 = vmax.f32 %v156, 0.0
    %v179 = vmax.f32 %v161, 0.0
    %v180 = vmax.f32 %v166, 0.0
    %v181 = vmax.f32 %v171, 0.0
    %v182 = vld [vmem:[%s3] sm:$0xff]
    %v183 = vld [vmem:[%s3 + $0x8] sm:$0xff]
    %v184 = vld [vmem:[%s3 + $0x10] sm:$0xff]
    %v185 = vld [vmem:[%s3 + $0x18] sm:$0xff]
    %v186 = vld [vmem:[%s4] sm:$0x1]
    %v188 = vlaneseq
    %v189 = vshrl.u32 %v188, 7
    %v190 = vsub.s32 0, %v189
    %v191 = vrot.slane %v186, %v190
    %vm193 = vcmask 261120
    %v195 = vsel %vm193, %v174, 0
    %v198 = vsel %vm193, %v175, 0
    %v201 = vsel %vm193, %v176, 0
    %v204 = vsel %vm193, %v177, 0
    %v207 = vsel %vm193, %v178, 0
    %v210 = vsel %vm193, %v179, 0
    %v213 = vsel %vm193, %v180, 0
    %v216 = vsel %vm193, %v181, 0
    %218 = vmatprep.subr.mxu0 0.0
    %219 = vmatpush1.msra.mxu0 %v182
    %220 = vmatprep.subr.mxu0 0.0
    %221 = vmatpush1.msra.mxu0 %v183
    %222 = vmatprep.subr.mxu0 0.0
    %223 = vmatpush1.msra.mxu0 %v184
    %224 = vmatprep.subr.mxu0 0.0
    %225 = vmatpush1.msra.mxu0 %v185
    %226 = vmatprep.subr.mxu0 0.0
    %227 = vmatpush1.msra.mxu0 0.0
    %228 = vmatprep.subr.mxu0 0.0
    %229 = vmatpush1.msra.mxu0 0.0
    %230 = vmatprep.subr.mxu0 0.0
    %231 = vmatpush1.msra.mxu0 0.0
    %232 = vmatprep.subr.mxu0 0.0
    %233 = vmatpush1.msra.mxu0 0.0
    %234 = vmatprep.subr.mxu0 0.0
    %235 = vmatpush1.msra.mxu0 0.0
    %236 = vmatprep.subr.mxu0 0.0
    %237 = vmatpush1.msra.mxu0 0.0
    %238 = vmatprep.subr.mxu0 0.0
    %239 = vmatpush1.msra.mxu0 0.0
    %240 = vmatprep.subr.mxu0 0.0
    %241 = vmatpush1.msra.mxu0 0.0
    %242 = vmatprep.subr.mxu0 0.0
    %243 = vmatpush1.msra.mxu0 0.0
    %244 = vmatprep.subr.mxu0 0.0
    %245 = vmatpush1.msra.mxu0 0.0
    %246 = vmatprep.subr.mxu0 0.0
    %247 = vmatpush1.msra.mxu0 0.0
    %248 = vmatprep.subr.mxu0 0.0
    %249 = vmatpush1.msra.mxu0 0.0
    %250 = vmatprep.subr.mxu0 0.0
    %251 = vmatpush1.msra.mxu0 0.0
    %252 = vmatprep.subr.mxu0 0.0
    %253 = vmatpush1.msra.mxu0 0.0
    %254 = vmatprep.subr.mxu0 0.0
    %255 = vmatpush1.msra.mxu0 0.0
    %256 = vmatprep.subr.mxu0 0.0
    %257 = vmatpush1.msra.mxu0 0.0
    %258 = vmatprep.subr.mxu0 0.0
    %259 = vmatpush1.msra.mxu0 0.0
    %260 = vmatprep.subr.mxu0 0.0
    %261 = vmatpush1.msra.mxu0 0.0
    %262 = vmatprep.subr.mxu0 0.0
    %263 = vmatpush1.msra.mxu0 0.0
    %264 = vmatprep.subr.mxu0 0.0
    %265 = vmatpush1.msra.mxu0 0.0
    %266 = vmatprep.subr.mxu0 0.0
    %267 = vmatpush1.msra.mxu0 0.0
    %268 = vmatprep.subr.mxu0 0.0
    %269 = vmatpush1.msra.mxu0 0.0
    %270 = vmatprep.subr.mxu0 0.0
    %271 = vmatpush1.msra.mxu0 0.0
    %272 = vmatprep.subr.mxu0 0.0
    %273 = vmatpush1.msra.mxu0 0.0
    %274 = vmatprep.subr.mxu0 0.0
    %275 = vmatpush1.msra.mxu0 0.0
    %276 = vmatprep.subr.mxu0 0.0
    %277 = vmatpush1.msra.mxu0 0.0
    %278 = vmatprep.subr.mxu0 0.0
    %279 = vmatpush1.msra.mxu0 0.0
    %280 = vmatprep.subr.mxu0 0.0
    %281 = vmatpush1.msra.mxu0 0.0
    %282 = vmatprep.mubr.f32.mxu0 0.0
    %283 = vmatmul.mubr.f32.gmra.mrb[0].mxu0 %v195
    %v284 = vpop.f32.mrb[0].mxu0
    %v285 = vadd.f32 %v191, %v284
    %v286 = vpop.f32.mrb[0].mxu0
    %287 = vmatprep.mubr.f32.mxu0 0.0
    %288 = vmatmul.mubr.f32.gmra.mrb[0].mxu0 %v198
    %v289 = vpop.f32.mrb[0].mxu0
    %v290 = vadd.f32 %v191, %v289
    %v291 = vpop.f32.mrb[0].mxu0
    %292 = vmatprep.mubr.f32.mxu0 0.0
    %293 = vmatmul.mubr.f32.gmra.mrb[0].mxu0 %v201
    %v294 = vpop.f32.mrb[0].mxu0
    %v295 = vadd.f32 %v191, %v294
    %v296 = vpop.f32.mrb[0].mxu0
    %297 = vmatprep.mubr.f32.mxu0 0.0
    %298 = vmatmul.mubr.f32.gmra.mrb[0].mxu0 %v204
    %v299 = vpop.f32.mrb[0].mxu0
    %v300 = vadd.f32 %v191, %v299
    %v301 = vpop.f32.mrb[0].mxu0
    %302 = vmatprep.mubr.f32.mxu0 0.0
    %303 = vmatmul.mubr.f32.gmra.mrb[0].mxu0 %v207
    %v304 = vpop.f32.mrb[0].mxu0
    %v305 = vadd.f32 %v191, %v304
    %v306 = vpop.f32.mrb[0].mxu0
    %307 = vmatprep.mubr.f32.mxu0 0.0
    %308 = vmatmul.mubr.f32.gmra.mrb[0].mxu0 %v210
    %v309 = vpop.f32.mrb[0].mxu0
    %v310 = vadd.f32 %v191, %v309
    %v311 = vpop.f32.mrb[0].mxu0
    %312 = vmatprep.mubr.f32.mxu0 0.0
    %313 = vmatmul.mubr.f32.gmra.mrb[0].mxu0 %v213
    %v314 = vpop.f32.mrb[0].mxu0
    %v315 = vadd.f32 %v191, %v314
    %v316 = vpop.f32.mrb[0].mxu0
    %317 = vmatprep.mubr.f32.mxu0 0.0
    %318 = vmatmul.mubr.f32.gmra.mrb[0].mxu0 %v216
    %v319 = vpop.f32.mrb[0].mxu0
    %v320 = vadd.f32 %v191, %v319
    %v321 = vpop.f32.mrb[0].mxu0
    %322 = vdwg.mxu0
    %v323 = vadd.f32 %v285, %v21
    %v324 = vadd.f32 %v290, %v22
    %v325 = vadd.f32 %v295, %v23
    %v326 = vadd.f32 %v300, %v24
    %v327 = vadd.f32 %v305, %v25
    %v328 = vadd.f32 %v310, %v26
    %v329 = vadd.f32 %v315, %v27
    %v330 = vadd.f32 %v320, %v28
    %331 = vst.msk [vmem:[#allocation2] sm:$0xff] %vm44, %v323
    %332 = vst.msk [vmem:[#allocation2 + $0x8] sm:$0xff] %vm44, %v324
    %333 = vst.msk [vmem:[#allocation2 + $0x10] sm:$0xff] %vm44, %v325
    %334 = vst.msk [vmem:[#allocation2 + $0x18] sm:$0xff] %vm44, %v326
    %335 = vst.msk [vmem:[#allocation2 + $0x20] sm:$0xff] %vm44, %v327
    %336 = vst.msk [vmem:[#allocation2 + $0x28] sm:$0xff] %vm44, %v328
    %337 = vst.msk [vmem:[#allocation2 + $0x30] sm:$0xff] %vm44, %v329
    %338 = vst.msk [vmem:[#allocation2 + $0x38] sm:$0xff] %vm44, %v330
    // Predicated region
    $region22: #{tpu_custom_call.1} parent=1 // pred_check
      _
    $region23: #{tpu_custom_call.1} parent=1 // pred_check_branch
      %340 = sbr.rel (0) target = $region25
    $region24: #{tpu_custom_call.1} parent=1 // pred_region
      %s342 = ssub.s32 1024, 1024
      %343 = vsyncadd [#allocation3], %s342
      %s344 = sshll.u32 [#allocation2], 4
      %s345 = int_to_ptr.vmem [resolvable:$true] %s344
      %350 = dma.vmem_to_hbm [thread:$0]  %s345, 1024, %s5, [#allocation3], 128, 128, 8
    $region25: #{tpu_custom_call.1} parent=1 // pred_fallthru
      _
    // Predicated region
    $region26: #{tpu_custom_call.1} parent=1 // pred_check
      _
    $region27: #{tpu_custom_call.1} parent=1 // pred_check_branch
      %352 = sbr.rel (0) target = $region29
    $region28: #{tpu_custom_call.1} parent=1 // pred_region
      %353 = dma.done [#allocation3], 1024
    $region29: #{tpu_custom_call.1} parent=1 // pred_fallthru
      _
    %354 = vsyncpa [#allocation3], 1

</llo_original>
